<compile_context>
chip_gen: v5e
topology: v5e:2x2
jax: 0.10.0
libtpu: 0.0.40
codegen_flags: <defaults>
</compile_context>

<pallas_src>
import functools

import jax
import jax.numpy as jnp
from jax.experimental import pallas as pl
from jax.experimental.pallas import tpu as pltpu


HIDDEN = 64


def _round_up(x, m):
    return ((x + m - 1) // m) * m


# --------------------------------------------------------------------------- #
# Kernel
# --------------------------------------------------------------------------- #
def encoder_forward_kernel(x_ref, w1_ref, b1_ref, w2_ref, b2_ref, w3_ref, b3_ref,
                           out_ref):
    x = x_ref[...]                                        # (tile_b, in_pad)

    # Layer 1: packed single matmul (delta already folded into w1), f32 accum.
    z1 = jnp.dot(x, w1_ref[...], preferred_element_type=jnp.float32) + b1_ref[...]
    h1 = jnp.where(z1 >= 0, z1, 0.01 * z1)                # LeakyReLU(0.01)

    # Layer 2: Linear + Tanh (elementwise kept in f32 for v5e compatibility).
    z2 = jnp.dot(h1.astype(w2_ref.dtype), w2_ref[...],
                 preferred_element_type=jnp.float32) + b2_ref[...]
    h2 = jnp.tanh(z2)

    # Output layer + clamp(-5, 5).
    z3 = jnp.dot(h2.astype(w3_ref.dtype), w3_ref[...],
                 preferred_element_type=jnp.float32) + b3_ref[...]
    out_ref[...] = jnp.clip(z3, -5.0, 5.0).astype(out_ref.dtype)


# --------------------------------------------------------------------------- #
# Wrapper
# --------------------------------------------------------------------------- #
def encoder_forward_model(obs, act, obs2, packed_params, *,
                          tile_b=1024, compute_dtype=jnp.float32):
    """Runs the encoder MLP as a batch-tiled, pipelined Pallas kernel."""
    B, obs_dim = obs.shape
    act_dim = act.shape[1]
    in_dim = 2 * obs_dim + act_dim

    w1 = packed_params["w1"].astype(compute_dtype)        # (in_pad, H)
    w2 = packed_params["w2"].astype(compute_dtype)        # (H, H)
    w3 = packed_params["w3"].astype(compute_dtype)        # (H, emb_dim)
    b1 = packed_params["b1"].astype(jnp.float32)          # (1, H)
    b2 = packed_params["b2"].astype(jnp.float32)          # (1, H)
    b3 = packed_params["b3"].astype(jnp.float32)          # (1, emb_dim)
    in_pad, hidden = w1.shape
    emb_dim = w3.shape[1]

    # Batch tiling: tile must be a multiple of 8 (f32) / 16 (bf16); 64 covers both.
    tile_b = max(8, min(tile_b, _round_up(B, 8)))
    tile_b = _round_up(tile_b, 16) if tile_b > 8 else tile_b
    B_pad = _round_up(B, tile_b)

    # Pack [obs | obs2 | act | 0-pad] into one dense lane-padded array.
    x = jnp.concatenate([obs, obs2, act], axis=-1).astype(compute_dtype)
    pad_rows, pad_cols = B_pad - B, in_pad - in_dim
    if pad_rows or pad_cols:
        x = jnp.pad(x, ((0, pad_rows), (0, pad_cols)))

    grid = (B_pad // tile_b,)

    row_map = lambda i: (i, 0)       # batch-tiled operands
    const_map = lambda i: (0, 0)     # weights/biases resident across the grid

    dsize = jnp.dtype(compute_dtype).itemsize
    flops = 2 * B_pad * (in_pad * hidden + hidden * hidden + hidden * emb_dim)
    bytes_accessed = int(
        B_pad * in_pad * dsize                 # input tiles
        + B_pad * emb_dim * 4                  # output tiles (f32)
        + (w1.size + w2.size + w3.size) * dsize
        + (b1.size + b2.size + b3.size) * 4)

    out = pl.pallas_call(
        encoder_forward_kernel,
        out_shape=jax.ShapeDtypeStruct((B_pad, emb_dim), jnp.float32),
        grid_spec=pltpu.PrefetchScalarGridSpec(
            num_scalar_prefetch=0,
            grid=grid,
            in_specs=[
                pl.BlockSpec((tile_b, in_pad), row_map),
                pl.BlockSpec(w1.shape, const_map),
                pl.BlockSpec(b1.shape, const_map),
                pl.BlockSpec(w2.shape, const_map),
                pl.BlockSpec(b2.shape, const_map),
                pl.BlockSpec(w3.shape, const_map),
                pl.BlockSpec(b3.shape, const_map),
            ],
            out_specs=pl.BlockSpec((tile_b, emb_dim), row_map),
        ),
        compiler_params=pltpu.CompilerParams(
            dimension_semantics=("parallel",),
            vmem_limit_bytes=32 * 1024 * 1024,
        ),
        cost_estimate=pl.CostEstimate(
            flops=flops,
            transcendentals=B_pad * hidden,
            bytes_accessed=bytes_accessed,
        ),
    )(x, w1, b1, w2, b2, w3, b3)

    return out[:B]


# --------------------------------------------------------------------------- #
# Parameters (PyTorch-Linear-style init) and packing
# --------------------------------------------------------------------------- #
def init_params(key, obs_dim, act_dim, emb_dim, hidden=HIDDEN):
    """Synthetic parameters.  W stored as [in_features, out_features]."""
    input_dim = 2 * obs_dim + act_dim
    keys = jax.random.split(key, 6)

    def uniform(k, shape, fan_in):
        bound = 1.0 / jnp.sqrt(fan_in)
        return jax.random.uniform(k, shape, jnp.float32, -bound, bound)

    return {
        "w1": uniform(keys[0], (input_dim, hidden), input_dim),
        "b1": uniform(keys[1], (hidden,), input_dim),
        "w2": uniform(keys[2], (hidden, hidden), hidden),
        "b2": uniform(keys[3], (hidden,), hidden),
        "w3": uniform(keys[4], (hidden, emb_dim), hidden),
        "b3": uniform(keys[5], (emb_dim,), hidden),
    }


def pack_params(params, obs_dim, act_dim, *, lane_multiple=8):
    """Fold the obs2-obs delta into W1 and lane-pad it; reshape biases to (1, N).

    concat([obs, obs2-obs, act]) @ W1 == concat([obs, obs2, act, pad]) @ W1_eff
    with W1_eff = [W1_obs - W1_delta ; W1_delta ; W1_act ; 0].
    Do this once and reuse across calls.
    """
    w1 = params["w1"]
    hidden = w1.shape[1]
    in_dim = 2 * obs_dim + act_dim
    in_pad = _round_up(in_dim, lane_multiple)

    w1_obs = w1[:obs_dim]
    w1_delta = w1[obs_dim:2 * obs_dim]
    w1_act = w1[2 * obs_dim:]
    w1_eff = jnp.concatenate(
        [w1_obs - w1_delta, w1_delta, w1_act,
         jnp.zeros((in_pad - in_dim, hidden), w1.dtype)], axis=0)

    return {
        "w1": w1_eff,
        "b1": params["b1"].reshape(1, -1),
        "w2": params["w2"],
        "b2": params["b2"].reshape(1, -1),
        "w3": params["w3"],
        "b3": params["b3"].reshape(1, -1),
    }


# --------------------------------------------------------------------------- #
# Plain-JAX reference (mirrors the PyTorch forward exactly)
# --------------------------------------------------------------------------- #
def reference_forward(obs, act, obs2, params):
    delta = obs2 - obs
    x = jnp.concatenate([obs, delta, act], axis=-1)
    z1 = x @ params["w1"] + params["b1"]
    h1 = jnp.where(z1 >= 0, z1, 0.01 * z1)
    h2 = jnp.tanh(h1 @ params["w2"] + params["b2"])
    mean = h2 @ params["w3"] + params["b3"]
    return jnp.clip(mean, -5.0, 5.0)


if __name__ == "__main__":
    obs_dim, act_dim, emb_dim = 11, 3, 8
    batch = 200  # deliberately not a multiple of the tile to exercise padding

    key = jax.random.PRNGKey(0)
    k_obs, k_act, k_obs2, k_params = jax.random.split(key, 4)

    obs = jax.random.normal(k_obs, (batch, obs_dim), jnp.float32)
    act = jax.random.normal(k_act, (batch, act_dim), jnp.float32)
    obs2 = jax.random.normal(k_obs2, (batch, obs_dim), jnp.float32)

    params = init_params(k_params, obs_dim, act_dim, emb_dim)
    packed = pack_params(params, obs_dim, act_dim)
    ref = reference_forward(obs, act, obs2, params)

    # f32 path (exact semantics; small tile to exercise a multi-step grid).
    out_f32 = jax.block_until_ready(
        encoder_forward_model(obs, act, obs2, packed, tile_b=64))
    assert out_f32.shape == (batch, emb_dim)
    assert jnp.allclose(out_f32, ref, atol=1e-4, rtol=1e-4), \
        "Pallas f32 result mismatch vs reference"

    # bf16 activations/weights (memory-bound speedup on v6e/v7x); loose tolerance.
    out_bf16 = jax.block_until_ready(
        encoder_forward_model(obs, act, obs2, packed, tile_b=64,
                              compute_dtype=jnp.bfloat16))
    assert out_bf16.shape == (batch, emb_dim)
    assert bool(jnp.all(jnp.isfinite(out_bf16)))
    assert float(jnp.max(jnp.abs(out_bf16 - ref))) < 0.2, \
        "Pallas bf16 result too far from reference"

    print("KERNEL_OK")
</pallas_src>

<mosaic_0001>
module attributes {stable_mosaic.version = 11 : i64} {
  func.func @encoder_forward_kernel(%arg0: i32, %arg1: memref<64x32xf32, #tpu.memory_space<vmem>>, %arg2: memref<32x64xf32, #tpu.memory_space<vmem>>, %arg3: memref<1x64xf32, #tpu.memory_space<vmem>>, %arg4: memref<64x64xf32, #tpu.memory_space<vmem>>, %arg5: memref<1x64xf32, #tpu.memory_space<vmem>>, %arg6: memref<64x8xf32, #tpu.memory_space<vmem>>, %arg7: memref<1x8xf32, #tpu.memory_space<vmem>>, %arg8: memref<64x8xf32, #tpu.memory_space<vmem>>) attributes {dimension_semantics = [#tpu.dimension_semantics<parallel>], iteration_bounds = array<i64: 4>, scalar_prefetch = 0 : i64, scratch_operands = 0 : i64, tpu.core_type = #tpu.core_type<tc>, window_params = [{transform_indices = @transform_0, window_bounds = array<i64: 64, 32>}, {pipeline_mode = #tpu.pipeline_mode<synchronous>, transform_indices = @transform_1, window_bounds = array<i64: 32, 64>}, {pipeline_mode = #tpu.pipeline_mode<synchronous>, transform_indices = @transform_2, window_bounds = array<i64: 1, 64>}, {pipeline_mode = #tpu.pipeline_mode<synchronous>, transform_indices = @transform_3, window_bounds = array<i64: 64, 64>}, {pipeline_mode = #tpu.pipeline_mode<synchronous>, transform_indices = @transform_4, window_bounds = array<i64: 1, 64>}, {pipeline_mode = #tpu.pipeline_mode<synchronous>, transform_indices = @transform_5, window_bounds = array<i64: 64, 8>}, {pipeline_mode = #tpu.pipeline_mode<synchronous>, transform_indices = @transform_6, window_bounds = array<i64: 1, 8>}, {transform_indices = @transform_7, window_bounds = array<i64: 64, 8>}]} {
    %c0 = arith.constant 0 : index
    %c0_0 = arith.constant 0 : index
    %0 = vector.load %arg1[%c0, %c0_0] : memref<64x32xf32, #tpu.memory_space<vmem>>, vector<64x32xf32>
    %c0_1 = arith.constant 0 : index
    %c0_2 = arith.constant 0 : index
    %1 = vector.load %arg2[%c0_1, %c0_2] : memref<32x64xf32, #tpu.memory_space<vmem>>, vector<32x64xf32>
    %cst = arith.constant dense<0.000000e+00> : vector<64x64xf32>
    %2 = tpu.matmul %0, %1, %cst {dimension_numbers = #tpu.dot_dimension_numbers<[1], [0], [0], [1], [0, 0, 1, 1], [], []>} : vector<64x32xf32>, vector<32x64xf32>, vector<64x64xf32> -> vector<64x64xf32>
    %c0_3 = arith.constant 0 : index
    %c0_4 = arith.constant 0 : index
    %3 = vector.load %arg3[%c0_3, %c0_4] : memref<1x64xf32, #tpu.memory_space<vmem>>, vector<1x64xf32>
    %4 = vector.broadcast %3 : vector<1x64xf32> to vector<64x64xf32>
    %5 = arith.addf %2, %4 : vector<64x64xf32>
    %cst_5 = arith.constant 0.000000e+00 : f32
    %6 = vector.broadcast %cst_5 : f32 to vector<64x64xf32>
    %7 = arith.cmpf oge, %5, %6 : vector<64x64xf32>
    %cst_6 = arith.constant 0.00999999977 : f32
    %8 = vector.broadcast %cst_6 : f32 to vector<64x64xf32>
    %9 = arith.mulf %8, %5 : vector<64x64xf32>
    %10 = arith.select %7, %5, %9 : vector<64x64xi1>, vector<64x64xf32>
    %c0_7 = arith.constant 0 : index
    %c0_8 = arith.constant 0 : index
    %11 = vector.load %arg4[%c0_7, %c0_8] : memref<64x64xf32, #tpu.memory_space<vmem>>, vector<64x64xf32>
    %cst_9 = arith.constant dense<0.000000e+00> : vector<64x64xf32>
    %12 = tpu.matmul %10, %11, %cst_9 {dimension_numbers = #tpu.dot_dimension_numbers<[1], [0], [0], [1], [0, 0, 1, 1], [], []>} : vector<64x64xf32>, vector<64x64xf32>, vector<64x64xf32> -> vector<64x64xf32>
    %c0_10 = arith.constant 0 : index
    %c0_11 = arith.constant 0 : index
    %13 = vector.load %arg5[%c0_10, %c0_11] : memref<1x64xf32, #tpu.memory_space<vmem>>, vector<1x64xf32>
    %14 = vector.broadcast %13 : vector<1x64xf32> to vector<64x64xf32>
    %15 = arith.addf %12, %14 : vector<64x64xf32>
    %16 = math.tanh %15 : vector<64x64xf32>
    %c0_12 = arith.constant 0 : index
    %c0_13 = arith.constant 0 : index
    %17 = vector.load %arg6[%c0_12, %c0_13] : memref<64x8xf32, #tpu.memory_space<vmem>>, vector<64x8xf32>
    %cst_14 = arith.constant dense<0.000000e+00> : vector<64x8xf32>
    %18 = tpu.matmul %16, %17, %cst_14 {dimension_numbers = #tpu.dot_dimension_numbers<[1], [0], [0], [1], [0, 0, 1, 1], [], []>} : vector<64x64xf32>, vector<64x8xf32>, vector<64x8xf32> -> vector<64x8xf32>
    %c0_15 = arith.constant 0 : index
    %c0_16 = arith.constant 0 : index
    %19 = vector.load %arg7[%c0_15, %c0_16] : memref<1x8xf32, #tpu.memory_space<vmem>>, vector<1x8xf32>
    %20 = vector.broadcast %19 : vector<1x8xf32> to vector<64x8xf32>
    %21 = arith.addf %18, %20 : vector<64x8xf32>
    %cst_17 = arith.constant -5.000000e+00 : f32
    %cst_18 = arith.constant 5.000000e+00 : f32
    %22 = vector.broadcast %cst_17 : f32 to vector<64x8xf32>
    %23 = arith.maximumf %22, %21 : vector<64x8xf32>
    %24 = vector.broadcast %cst_18 : f32 to vector<64x8xf32>
    %25 = arith.minimumf %24, %23 : vector<64x8xf32>
    %c0_19 = arith.constant 0 : index
    %c0_20 = arith.constant 0 : index
    %26 = vector.load %arg8[%c0_19, %c0_20] : memref<64x8xf32, #tpu.memory_space<vmem>>, vector<64x8xf32>
    tpu.vector_store %arg8[%c0_19, %c0_20], %25 {strides = array<i32>} : memref<64x8xf32, #tpu.memory_space<vmem>>, vector<64x8xf32>,
    return
  }
  func.func @transform_0(%arg0: i32) -> (i32, i32) {
    %c0_i32 = arith.constant 0 : i32
    %c0_i32_0 = arith.constant 0 : i32
    return %arg0, %c0_i32 : i32, i32
  }
  func.func @transform_1(%arg0: i32) -> (i32, i32) {
    %c0_i32 = arith.constant 0 : i32
    %c0_i32_0 = arith.constant 0 : i32
    %c0_i32_1 = arith.constant 0 : i32
    return %c0_i32, %c0_i32_0 : i32, i32
  }
  func.func @transform_2(%arg0: i32) -> (i32, i32) {
    %c0_i32 = arith.constant 0 : i32
    %c0_i32_0 = arith.constant 0 : i32
    %c0_i32_1 = arith.constant 0 : i32
    return %c0_i32, %c0_i32_0 : i32, i32
  }
  func.func @transform_3(%arg0: i32) -> (i32, i32) {
    %c0_i32 = arith.constant 0 : i32
    %c0_i32_0 = arith.constant 0 : i32
    %c0_i32_1 = arith.constant 0 : i32
    return %c0_i32, %c0_i32_0 : i32, i32
  }
  func.func @transform_4(%arg0: i32) -> (i32, i32) {
    %c0_i32 = arith.constant 0 : i32
    %c0_i32_0 = arith.constant 0 : i32
    %c0_i32_1 = arith.constant 0 : i32
    return %c0_i32, %c0_i32_0 : i32, i32
  }
  func.func @transform_5(%arg0: i32) -> (i32, i32) {
    %c0_i32 = arith.constant 0 : i32
    %c0_i32_0 = arith.constant 0 : i32
    %c0_i32_1 = arith.constant 0 : i32
    return %c0_i32, %c0_i32_0 : i32, i32
  }
  func.func @transform_6(%arg0: i32) -> (i32, i32) {
    %c0_i32 = arith.constant 0 : i32
    %c0_i32_0 = arith.constant 0 : i32
    %c0_i32_1 = arith.constant 0 : i32
    return %c0_i32, %c0_i32_0 : i32, i32
  }
  func.func @transform_7(%arg0: i32) -> (i32, i32) {
    %c0_i32 = arith.constant 0 : i32
    %c0_i32_0 = arith.constant 0 : i32
    return %arg0, %c0_i32 : i32, i32
  }
}

</mosaic_0001>

<llo_original>
// kernel: tpu_custom_call.1
$region0: #{tpu_custom_call.1}
  #allocation0 [shape = 'u32[]', space=smem, size = 0x4, offset = 0x4, fixed_abs, tag = 'smem constant byte address 0x4 - core index']
  #allocation1 [shape = 'u32[72,128]{1,0:T(1,128)}', space=vmem, size = 0x9000, scoped, tag = 'internal scratch']
  %s0 = inlined_call_operand.vmem [shape: f32[256,32], index: 0, kind: input, shape index: {}]
  %s1 = inlined_call_operand.vmem [shape: f32[32,64], index: 1, kind: input, shape index: {}]
  %s2 = inlined_call_operand.vmem [shape: f32[1,64], index: 2, kind: input, shape index: {}]
  %s3 = inlined_call_operand.vmem [shape: f32[64,64], index: 3, kind: input, shape index: {}]
  %s4 = inlined_call_operand.vmem [shape: f32[1,64], index: 4, kind: input, shape index: {}]
  %s5 = inlined_call_operand.vmem [shape: f32[64,8], index: 5, kind: input, shape index: {}]
  %s6 = inlined_call_operand.vmem [shape: f32[1,8], index: 6, kind: input, shape index: {}]
  %s7 = inlined_call_operand.vmem [shape: f32[256,8], index: 7, kind: output, shape index: {}]
  %s8 = sld [smem:[#allocation0]]
  $region61: #{tpu_custom_call.1} parent=0
    _
  %s10 = ssub.s32 1, %s8
  %s11 = scalar_select 0, %s10, %s8
  loop: start=0, step=1, limit=6
  $region2: #{tpu_custom_call.1} parent=0 // loop_pre_header
    _
  $region3: #{tpu_custom_call.1} parent=0 // loop_header
    %s13 = sphi 0, %s17
    %p14 = scmp.ge.s32.totalorder %s13, 6
    %s23 = sphi 0, %s25
    %s26 = sphi 0, %s23
    %s27 = sphi 0, %s26
    %s43 = sphi 0, %s27
    %s47 = sphi 0, %s47
    %s49 = sphi 0, %s47
    %s50 = sphi 0, %s49
    %s64 = sphi 0, %s50
    %s68 = sphi 0, %s68
    %s70 = sphi 0, %s68
    %s71 = sphi 0, %s70
    %s85 = sphi 0, %s71
    %s89 = sphi 0, %s89
    %s91 = sphi 0, %s89
    %s92 = sphi 0, %s91
    %s106 = sphi 0, %s92
    %s110 = sphi 0, %s110
    %s112 = sphi 0, %s110
    %s113 = sphi 0, %s112
    %s127 = sphi 0, %s113
    %s131 = sphi 0, %s131
    %s133 = sphi 0, %s131
    %s134 = sphi 0, %s133
    %s148 = sphi 0, %s134
    %s152 = sphi 0, %s152
    %s154 = sphi 0, %s152
    %s155 = sphi 0, %s154
    %s169 = sphi 0, %s155
    %s175 = sphi 0, %s177
    %s178 = sphi 0, %s175
    %s179 = sphi 0, %s178
    %s195 = sphi 0, %s179
  $region4: #{tpu_custom_call.1} parent=0 // loop_header_branch
    %16 = sbr.rel (%p14) target = $region8
  $region5: #{tpu_custom_call.1} parent=0 // loop_body
    %s18 = ssub.s32 %s13, 1
    %s19 = ssub.s32 %s13, 2
    %s20 = sadd.s32 %s13, 1
    %s21 = ssub.s32 %s13, %s20
    %p22 = scmp.eq.s32.totalorder %s21, 0
    %s24 = sadd.s32 %s23, 1
    %s25 = scalar_select %p22, %s23, %s24
    %p28 = pneg %p22
    %p29 = scmp.eq.s32.totalorder %s13, 3
    %p30 = por %p28, %p29
    %p31 = scmp.ne.s32.totalorder %s23, %s26
    %p32 = scmp.eq.s32.totalorder %s13, 0
    %p33 = por %p31, %p32
    %p34 = scmp.ne.s32.totalorder %s23, %s26
    %p35 = scmp.eq.s32.totalorder %s18, 3
    %p36 = por %p34, %p35
    %p37 = scmp.ne.s32.totalorder %s26, %s27
    %p38 = scmp.eq.s32.totalorder %s18, 0
    %p39 = por %p37, %p38
    %p40 = scmp.ne.s32.totalorder %s26, %s27
    %p41 = scmp.eq.s32.totalorder %s19, 3
    %p42 = por %p40, %p41
    %p44 = scmp.ne.s32.totalorder %s27, %s43
    %p45 = scmp.eq.s32.totalorder %s19, 0
    %p46 = por %p44, %p45
    %s48 = sadd.s32 %s47, 1
    %p51 = scmp.eq.s32.totalorder %s13, 3
    %p52 = scmp.ne.s32.totalorder %s47, %s49
    %p53 = scmp.eq.s32.totalorder %s13, 0
    %p54 = por %p52, %p53
    %p55 = scmp.ne.s32.totalorder %s47, %s49
    %p56 = scmp.eq.s32.totalorder %s18, 3
    %p57 = por %p55, %p56
    %p58 = scmp.ne.s32.totalorder %s49, %s50
    %p59 = scmp.eq.s32.totalorder %s18, 0
    %p60 = por %p58, %p59
    %p61 = scmp.ne.s32.totalorder %s49, %s50
    %p62 = scmp.eq.s32.totalorder %s19, 3
    %p63 = por %p61, %p62
    %p65 = scmp.ne.s32.totalorder %s50, %s64
    %p66 = scmp.eq.s32.totalorder %s19, 0
    %p67 = por %p65, %p66
    %s69 = sadd.s32 %s68, 1
    %p72 = scmp.eq.s32.totalorder %s13, 3
    %p73 = scmp.ne.s32.totalorder %s68, %s70
    %p74 = scmp.eq.s32.totalorder %s13, 0
    %p75 = por %p73, %p74
    %p76 = scmp.ne.s32.totalorder %s68, %s70
    %p77 = scmp.eq.s32.totalorder %s18, 3
    %p78 = por %p76, %p77
    %p79 = scmp.ne.s32.totalorder %s70, %s71
    %p80 = scmp.eq.s32.totalorder %s18, 0
    %p81 = por %p79, %p80
    %p82 = scmp.ne.s32.totalorder %s70, %s71
    %p83 = scmp.eq.s32.totalorder %s19, 3
    %p84 = por %p82, %p83
    %p86 = scmp.ne.s32.totalorder %s71, %s85
    %p87 = scmp.eq.s32.totalorder %s19, 0
    %p88 = por %p86, %p87
    %s90 = sadd.s32 %s89, 1
    %p93 = scmp.eq.s32.totalorder %s13, 3
    %p94 = scmp.ne.s32.totalorder %s89, %s91
    %p95 = scmp.eq.s32.totalorder %s13, 0
    %p96 = por %p94, %p95
    %p97 = scmp.ne.s32.totalorder %s89, %s91
    %p98 = scmp.eq.s32.totalorder %s18, 3
    %p99 = por %p97, %p98
    %p100 = scmp.ne.s32.totalorder %s91, %s92
    %p101 = scmp.eq.s32.totalorder %s18, 0
    %p102 = por %p100, %p101
    %p103 = scmp.ne.s32.totalorder %s91, %s92
    %p104 = scmp.eq.s32.totalorder %s19, 3
    %p105 = por %p103, %p104
    %p107 = scmp.ne.s32.totalorder %s92, %s106
    %p108 = scmp.eq.s32.totalorder %s19, 0
    %p109 = por %p107, %p108
    %s111 = sadd.s32 %s110, 1
    %p114 = scmp.eq.s32.totalorder %s13, 3
    %p115 = scmp.ne.s32.totalorder %s110, %s112
    %p116 = scmp.eq.s32.totalorder %s13, 0
    %p117 = por %p115, %p116
    %p118 = scmp.ne.s32.totalorder %s110, %s112
    %p119 = scmp.eq.s32.totalorder %s18, 3
    %p120 = por %p118, %p119
    %p121 = scmp.ne.s32.totalorder %s112, %s113
    %p122 = scmp.eq.s32.totalorder %s18, 0
    %p123 = por %p121, %p122
    %p124 = scmp.ne.s32.totalorder %s112, %s113
    %p125 = scmp.eq.s32.totalorder %s19, 3
    %p126 = por %p124, %p125
    %p128 = scmp.ne.s32.totalorder %s113, %s127
    %p129 = scmp.eq.s32.totalorder %s19, 0
    %p130 = por %p128, %p129
    %s132 = sadd.s32 %s131, 1
    %p135 = scmp.eq.s32.totalorder %s13, 3
    %p136 = scmp.ne.s32.totalorder %s131, %s133
    %p137 = scmp.eq.s32.totalorder %s13, 0
    %p138 = por %p136, %p137
    %p139 = scmp.ne.s32.totalorder %s131, %s133
    %p140 = scmp.eq.s32.totalorder %s18, 3
    %p141 = por %p139, %p140
    %p142 = scmp.ne.s32.totalorder %s133, %s134
    %p143 = scmp.eq.s32.totalorder %s18, 0
    %p144 = por %p142, %p143
    %p145 = scmp.ne.s32.totalorder %s133, %s134
    %p146 = scmp.eq.s32.totalorder %s19, 3
    %p147 = por %p145, %p146
    %p149 = scmp.ne.s32.totalorder %s134, %s148
    %p150 = scmp.eq.s32.totalorder %s19, 0
    %p151 = por %p149, %p150
    %s153 = sadd.s32 %s152, 1
    %p156 = scmp.eq.s32.totalorder %s13, 3
    %p157 = scmp.ne.s32.totalorder %s152, %s154
    %p158 = scmp.eq.s32.totalorder %s13, 0
    %p159 = por %p157, %p158
    %p160 = scmp.ne.s32.totalorder %s152, %s154
    %p161 = scmp.eq.s32.totalorder %s18, 3
    %p162 = por %p160, %p161
    %p163 = scmp.ne.s32.totalorder %s154, %s155
    %p164 = scmp.eq.s32.totalorder %s18, 0
    %p165 = por %p163, %p164
    %p166 = scmp.ne.s32.totalorder %s154, %s155
    %p167 = scmp.eq.s32.totalorder %s19, 3
    %p168 = por %p166, %p167
    %p170 = scmp.ne.s32.totalorder %s155, %s169
    %p171 = scmp.eq.s32.totalorder %s19, 0
    %p172 = por %p170, %p171
    %s173 = ssub.s32 %s13, %s20
    %p174 = scmp.eq.s32.totalorder %s173, 0
    %s176 = sadd.s32 %s175, 1
    %s177 = scalar_select %p174, %s175, %s176
    %p180 = pneg %p174
    %p181 = scmp.eq.s32.totalorder %s13, 3
    %p182 = por %p180, %p181
    %p183 = scmp.ne.s32.totalorder %s175, %s178
    %p184 = scmp.eq.s32.totalorder %s13, 0
    %p185 = por %p183, %p184
    %p186 = scmp.ne.s32.totalorder %s175, %s178
    %p187 = scmp.eq.s32.totalorder %s18, 3
    %p188 = por %p186, %p187
    %p189 = scmp.ne.s32.totalorder %s178, %s179
    %p190 = scmp.eq.s32.totalorder %s18, 0
    %p191 = por %p189, %p190
    %p192 = scmp.ne.s32.totalorder %s178, %s179
    %p193 = scmp.eq.s32.totalorder %s19, 3
    %p194 = por %p192, %p193
    %p196 = scmp.ne.s32.totalorder %s179, %s195
    %p197 = scmp.eq.s32.totalorder %s19, 0
    %p198 = por %p196, %p197
    %p199 = scmp.le.s32.totalorder 1, %s13
    %p200 = scmp.lt.s32.totalorder %s13, 5
    %p201 = pnand %p199, %p200
    %p202 = pneg %p201
    // Predicated region
    $region9: #{tpu_custom_call.1} parent=5 // pred_check
      _
    $region10: #{tpu_custom_call.1} parent=5 // pred_check_branch
      %204 = sbr.rel (%p201) target = $region12
    $region11: #{tpu_custom_call.1} parent=5 // pred_region
      %s205 = ssub.s32 %s13, 1
      // Predicated region
      $region13: #{tpu_custom_call.1} parent=11 // pred_check
        %p206 = pneg %p60
      $region14: #{tpu_custom_call.1} parent=11 // pred_check_branch
        %208 = sbr.rel (%p206) target = $region16
      $region15: #{tpu_custom_call.1} parent=11 // pred_region
        _
      $region16: #{tpu_custom_call.1} parent=11 // pred_fallthru
        _
      // Predicated region
      $region17: #{tpu_custom_call.1} parent=11 // pred_check
        %p209 = pneg %p81
      $region18: #{tpu_custom_call.1} parent=11 // pred_check_branch
        %211 = sbr.rel (%p209) target = $region20
      $region19: #{tpu_custom_call.1} parent=11 // pred_region
        _
      $region20: #{tpu_custom_call.1} parent=11 // pred_fallthru
        _
      // Predicated region
      $region21: #{tpu_custom_call.1} parent=11 // pred_check
        %p212 = pneg %p102
      $region22: #{tpu_custom_call.1} parent=11 // pred_check_branch
        %214 = sbr.rel (%p212) target = $region24
      $region23: #{tpu_custom_call.1} parent=11 // pred_region
        _
      $region24: #{tpu_custom_call.1} parent=11 // pred_fallthru
        _
      // Predicated region
      $region25: #{tpu_custom_call.1} parent=11 // pred_check
        %p215 = pneg %p123
      $region26: #{tpu_custom_call.1} parent=11 // pred_check_branch
        %217 = sbr.rel (%p215) target = $region28
      $region27: #{tpu_custom_call.1} parent=11 // pred_region
        _
      $region28: #{tpu_custom_call.1} parent=11 // pred_fallthru
        _
      // Predicated region
      $region29: #{tpu_custom_call.1} parent=11 // pred_check
        %p218 = pneg %p144
      $region30: #{tpu_custom_call.1} parent=11 // pred_check_branch
        %220 = sbr.rel (%p218) target = $region32
      $region31: #{tpu_custom_call.1} parent=11 // pred_region
        _
      $region32: #{tpu_custom_call.1} parent=11 // pred_fallthru
        _
      // Predicated region
      $region33: #{tpu_custom_call.1} parent=11 // pred_check
        %p221 = pneg %p165
      $region34: #{tpu_custom_call.1} parent=11 // pred_check_branch
        %223 = sbr.rel (%p221) target = $region36
      $region35: #{tpu_custom_call.1} parent=11 // pred_region
        _
      $region36: #{tpu_custom_call.1} parent=11 // pred_fallthru
        _
    $region12: #{tpu_custom_call.1} parent=5 // pred_fallthru
      _
    %p224 = scmp.lt.s32.totalorder %s13, 4
    // Predicated region
    $region37: #{tpu_custom_call.1} parent=5 // pred_check
      %p225 = pneg %p224
    $region38: #{tpu_custom_call.1} parent=5 // pred_check_branch
      %227 = sbr.rel (%p225) target = $region40
    $region39: #{tpu_custom_call.1} parent=5 // pred_region
      // Predicated region
      $region41: #{tpu_custom_call.1} parent=39 // pred_check
        %p228 = pneg %p33
      $region42: #{tpu_custom_call.1} parent=39 // pred_check_branch
        %230 = sbr.rel (%p228) target = $region44
      $region43: #{tpu_custom_call.1} parent=39 // pred_region
        %s231 = smul.u32 8, %s13
        %p232 = scmp.lt.s32.totalorder %s231, 31
        %s233 = scalar_select %p232, %s231, 31
        %s234 = smul.addr %s233, 8
        %s235 = scalar_lea.vmem %s0, %s234
        %s236 = smul.u32 8, %s13
      $region44: #{tpu_custom_call.1} parent=39 // pred_fallthru
        _
    $region40: #{tpu_custom_call.1} parent=5 // pred_fallthru
      _
    %p237 = scmp.le.s32.totalorder 1, %s13
    %p238 = scmp.lt.s32.totalorder %s13, 5
    %p239 = pnand %p237, %p238
    %p240 = pneg %p239
    // Predicated region
    $region45: #{tpu_custom_call.1} parent=5 // pred_check
      _
    $region46: #{tpu_custom_call.1} parent=5 // pred_check_branch
      %242 = sbr.rel (%p239) target = $region48
    $region47: #{tpu_custom_call.1} parent=5 // pred_region
      %s243 = ssub.s32 %s13, 1
      %s244 = smul.u32 8, %s18
      %p245 = scmp.lt.s32.totalorder %s244, 31
      %s246 = scalar_select %p245, %s244, 31
      %s247 = smul.addr %s246, 8
      %s248 = scalar_lea.vmem %s0, %s247
      %p249 = pneg %p39
      %p250 = pneg %p36
      %p251 = pneg %p60
      %p252 = pneg %p57
      %p253 = pneg %p81
      %p254 = pneg %p78
      %p255 = pneg %p102
      %p256 = pneg %p99
      %p257 = pneg %p123
      %p258 = pneg %p120
      %p259 = pneg %p144
      %p260 = pneg %p141
      %p261 = pneg %p165
      %p262 = pneg %p162
      %p263 = pneg %p191
      %p264 = pneg %p188
      %s265 = smul.u32 8, %s18
      %p266 = scmp.lt.s32.totalorder %s265, 31
      %s267 = scalar_select %p266, %s265, 31
      %s268 = smul.addr %s267, 8
      %s269 = scalar_lea.vmem %s7, %s268
      %s270 = smul.u32 8, %s18
      %p271 = scmp.lt.s32.totalorder %s270, 31
      %s272 = scalar_select %p271, %s270, 31
      %s273 = smul.addr %s272, 8
      %s274 = scalar_lea.vmem %s0, %s273
      %s275 = smul.u32 8, %s18
      %s276 = smul.u32 8, %s18
      %p277 = scmp.lt.s32.totalorder %s276, 31
      %s278 = scalar_select %p277, %s276, 31
      %s279 = smul.addr %s278, 8
      %s280 = scalar_lea.vmem %s7, %s279
      %s281 = smul.u32 8, %s18
      %v282 = vld [vmem:[%s274] sm:$0xff]
      %v283 = vld [vmem:[%s274 + $0x8] sm:$0xff]
      %v284 = vld [vmem:[%s274 + $0x10] sm:$0xff]
      %v285 = vld [vmem:[%s274 + $0x18] sm:$0xff]
      %v286 = vld [vmem:[%s274 + $0x20] sm:$0xff]
      %v287 = vld [vmem:[%s274 + $0x28] sm:$0xff]
      %v288 = vld [vmem:[%s274 + $0x30] sm:$0xff]
      %v289 = vld [vmem:[%s274 + $0x38] sm:$0xff]
      %v290 = vld [vmem:[%s1] sm:$0xff]
      %v291 = vld [vmem:[%s1 + $0x8] sm:$0xff]
      %v292 = vld [vmem:[%s1 + $0x10] sm:$0xff]
      %v293 = vld [vmem:[%s1 + $0x18] sm:$0xff]
      %v294 = vld [vmem:[%s2] sm:$0x1]
      %v296 = vperm.slane %v294, 0
      %vm298 = vcmask 261120
      %v300 = vsel %vm298, %v282, 0
      %v303 = vsel %vm298, %v283, 0
      %v306 = vsel %vm298, %v284, 0
      %v309 = vsel %vm298, %v285, 0
      %v312 = vsel %vm298, %v286, 0
      %v315 = vsel %vm298, %v287, 0
      %v318 = vsel %vm298, %v288, 0
      %v321 = vsel %vm298, %v289, 0
      %323 = vmatpush.msra.mxu0 0.0
      %324 = vmatpush.msra.mxu0 0.0
      %325 = vmatpush.msra.mxu0 0.0
      %326 = vmatpush.msra.mxu0 0.0
      %327 = vmatpush.msra.mxu0 0.0
      %328 = vmatpush.msra.mxu0 0.0
      %329 = vmatpush.msra.mxu0 0.0
      %330 = vmatpush.msra.mxu0 0.0
      %331 = vmatpush.msra.mxu0 0.0
      %332 = vmatpush.msra.mxu0 0.0
      %333 = vmatpush.msra.mxu0 0.0
      %334 = vmatpush.msra.mxu0 0.0
      %335 = vmatpush.msra.mxu0 %v293
      %336 = vmatpush.msra.mxu0 %v292
      %337 = vmatpush.msra.mxu0 %v291
      %338 = vmatpush.msra.mxu0 %v290
      %339 = vmatmul.f32.gmra.mxu0 %v300
      %v340 = vpop.f32.mrf.mxu0
      %v341 = vadd.f32 %v296, %v340
      %342 = vmatmul.f32.gmra.mxu0 %v303
      %v343 = vpop.f32.mrf.mxu0
      %v344 = vadd.f32 %v296, %v343
      %345 = vmatmul.f32.gmra.mxu0 %v306
      %v346 = vpop.f32.mrf.mxu0
      %v347 = vadd.f32 %v296, %v346
      %348 = vmatmul.f32.gmra.mxu0 %v309
      %v349 = vpop.f32.mrf.mxu0
      %v350 = vadd.f32 %v296, %v349
      %351 = vmatmul.f32.gmra.mxu0 %v312
      %v352 = vpop.f32.mrf.mxu0
      %v353 = vadd.f32 %v296, %v352
      %354 = vmatmul.f32.gmra.mxu0 %v315
      %v355 = vpop.f32.mrf.mxu0
      %v356 = vadd.f32 %v296, %v355
      %357 = vmatmul.f32.gmra.mxu0 %v318
      %v358 = vpop.f32.mrf.mxu0
      %v359 = vadd.f32 %v296, %v358
      %360 = vmatmul.f32.gmra.mxu0 %v321
      %v361 = vpop.f32.mrf.mxu0
      %v362 = vadd.f32 %v296, %v361
      %363 = vdwg.mxu0
      %vm364 = vcmp.ge.f32.partialorder %v341, 0.0
      %vm365 = vcmp.ge.f32.partialorder %v344, 0.0
      %vm366 = vcmp.ge.f32.partialorder %v347, 0.0
      %vm367 = vcmp.ge.f32.partialorder %v350, 0.0
      %vm368 = vcmp.ge.f32.partialorder %v353, 0.0
      %vm369 = vcmp.ge.f32.partialorder %v356, 0.0
      %vm370 = vcmp.ge.f32.partialorder %v359, 0.0
      %vm371 = vcmp.ge.f32.partialorder %v362, 0.0
      %v372 = vmul.f32 %v341, 0.01
      %v373 = vmul.f32 %v344, 0.01
      %v374 = vmul.f32 %v347, 0.01
      %v375 = vmul.f32 %v350, 0.01
      %v376 = vmul.f32 %v353, 0.01
      %v377 = vmul.f32 %v356, 0.01
      %v378 = vmul.f32 %v359, 0.01
      %v379 = vmul.f32 %v362, 0.01
      %v380 = vsel %vm364, %v341, %v372
      %v381 = vsel %vm365, %v344, %v373
      %v382 = vsel %vm366, %v347, %v374
      %v383 = vsel %vm367, %v350, %v375
      %v384 = vsel %vm368, %v353, %v376
      %v385 = vsel %vm369, %v356, %v377
      %v386 = vsel %vm370, %v359, %v378
      %v387 = vsel %vm371, %v362, %v379
      %v388 = vld [vmem:[%s3] sm:$0xff]
      %v389 = vld [vmem:[%s3 + $0x8] sm:$0xff]
      %v390 = vld [vmem:[%s3 + $0x10] sm:$0xff]
      %v391 = vld [vmem:[%s3 + $0x18] sm:$0xff]
      %v392 = vld [vmem:[%s3 + $0x20] sm:$0xff]
      %v393 = vld [vmem:[%s3 + $0x28] sm:$0xff]
      %v394 = vld [vmem:[%s3 + $0x30] sm:$0xff]
      %v395 = vld [vmem:[%s3 + $0x38] sm:$0xff]
      %v396 = vld [vmem:[%s4] sm:$0x1]
      %v398 = vperm.slane %v396, 0
      %vm400 = vcmask 523264
      %v402 = vsel %vm400, %v380, 0
      %v405 = vsel %vm400, %v381, 0
      %v408 = vsel %vm400, %v382, 0
      %v411 = vsel %vm400, %v383, 0
      %v414 = vsel %vm400, %v384, 0
      %v417 = vsel %vm400, %v385, 0
      %v420 = vsel %vm400, %v386, 0
      %v423 = vsel %vm400, %v387, 0
      %425 = vmatpush.msra.mxu0 0.0
      %426 = vmatpush.msra.mxu0 0.0
      %427 = vmatpush.msra.mxu0 0.0
      %428 = vmatpush.msra.mxu0 0.0
      %429 = vmatpush.msra.mxu0 0.0
      %430 = vmatpush.msra.mxu0 0.0
      %431 = vmatpush.msra.mxu0 0.0
      %432 = vmatpush.msra.mxu0 0.0
      %433 = vmatpush.msra.mxu0 %v395
      %434 = vmatpush.msra.mxu0 %v394
      %435 = vmatpush.msra.mxu0 %v393
      %436 = vmatpush.msra.mxu0 %v392
      %437 = vmatpush.msra.mxu0 %v391
      %438 = vmatpush.msra.mxu0 %v390
      %439 = vmatpush.msra.mxu0 %v389
      %440 = vmatpush.msra.mxu0 %v388
      %441 = vmatmul.f32.gmra.mxu0 %v402
      %v442 = vpop.f32.mrf.mxu0
      %v443 = vadd.f32 %v398, %v442
      %444 = vmatmul.f32.gmra.mxu0 %v405
      %v445 = vpop.f32.mrf.mxu0
      %v446 = vadd.f32 %v398, %v445
      %447 = vmatmul.f32.gmra.mxu0 %v408
      %v448 = vpop.f32.mrf.mxu0
      %v449 = vadd.f32 %v398, %v448
      %450 = vmatmul.f32.gmra.mxu0 %v411
      %v451 = vpop.f32.mrf.mxu0
      %v452 = vadd.f32 %v398, %v451
      %453 = vmatmul.f32.gmra.mxu0 %v414
      %v454 = vpop.f32.mrf.mxu0
      %v455 = vadd.f32 %v398, %v454
      %456 = vmatmul.f32.gmra.mxu0 %v417
      %v457 = vpop.f32.mrf.mxu0
      %v458 = vadd.f32 %v398, %v457
      %459 = vmatmul.f32.gmra.mxu0 %v420
      %v460 = vpop.f32.mrf.mxu0
      %v461 = vadd.f32 %v398, %v460
      %462 = vmatmul.f32.gmra.mxu0 %v423
      %v463 = vpop.f32.mrf.mxu0
      %v464 = vadd.f32 %v398, %v463
      %465 = vdwg.mxu0
      %v466 = vtanh.pop %v443
      %v467 = vtanh.pop %v446
      %v468 = vtanh.pop %v449
      %v469 = vtanh.pop %v452
      %v470 = vtanh.pop %v455
      %v471 = vtanh.pop %v458
      %v472 = vtanh.pop %v461
      %v473 = vtanh.pop %v464
      %v474 = vld [vmem:[%s5] sm:$0xff]
      %v475 = vld [vmem:[%s5 + $0x8] sm:$0xff]
      %v476 = vld [vmem:[%s5 + $0x10] sm:$0xff]
      %v477 = vld [vmem:[%s5 + $0x18] sm:$0xff]
      %v478 = vld [vmem:[%s5 + $0x20] sm:$0xff]
      %v479 = vld [vmem:[%s5 + $0x28] sm:$0xff]
      %v480 = vld [vmem:[%s5 + $0x30] sm:$0xff]
      %v481 = vld [vmem:[%s5 + $0x38] sm:$0xff]
      %v482 = vld [vmem:[%s6] sm:$0x1]
      %v484 = vperm.slane %v482, 0
      %v487 = vsel %vm400, %v466, 0
      %v490 = vsel %vm400, %v467, 0
      %v493 = vsel %vm400, %v468, 0
      %v496 = vsel %vm400, %v469, 0
      %v499 = vsel %vm400, %v470, 0
      %v502 = vsel %vm400, %v471, 0
      %v505 = vsel %vm400, %v472, 0
      %v508 = vsel %vm400, %v473, 0
      %510 = vmatpush.msra.mxu0 0.0
      %511 = vmatpush.msra.mxu0 0.0
      %512 = vmatpush.msra.mxu0 0.0
      %513 = vmatpush.msra.mxu0 0.0
      %514 = vmatpush.msra.mxu0 0.0
      %515 = vmatpush.msra.mxu0 0.0
      %516 = vmatpush.msra.mxu0 0.0
      %517 = vmatpush.msra.mxu0 0.0
      %518 = vmatpush.msra.mxu0 %v481
      %519 = vmatpush.msra.mxu0 %v480
      %520 = vmatpush.msra.mxu0 %v479
      %521 = vmatpush.msra.mxu0 %v478
      %522 = vmatpush.msra.mxu0 %v477
      %523 = vmatpush.msra.mxu0 %v476
      %524 = vmatpush.msra.mxu0 %v475
      %525 = vmatpush.msra.mxu0 %v474
      %526 = vmatmul.f32.gmra.mxu0 %v487
      %v527 = vpop.f32.mrf.mxu0
      %v528 = vadd.f32 %v484, %v527
      %529 = vmatmul.f32.gmra.mxu0 %v490
      %v530 = vpop.f32.mrf.mxu0
      %v531 = vadd.f32 %v484, %v530
      %532 = vmatmul.f32.gmra.mxu0 %v493
      %v533 = vpop.f32.mrf.mxu0
      %v534 = vadd.f32 %v484, %v533
      %535 = vmatmul.f32.gmra.mxu0 %v496
      %v536 = vpop.f32.mrf.mxu0
      %v537 = vadd.f32 %v484, %v536
      %538 = vmatmul.f32.gmra.mxu0 %v499
      %v539 = vpop.f32.mrf.mxu0
      %v540 = vadd.f32 %v484, %v539
      %541 = vmatmul.f32.gmra.mxu0 %v502
      %v542 = vpop.f32.mrf.mxu0
      %v543 = vadd.f32 %v484, %v542
      %544 = vmatmul.f32.gmra.mxu0 %v505
      %v545 = vpop.f32.mrf.mxu0
      %v546 = vadd.f32 %v484, %v545
      %547 = vmatmul.f32.gmra.mxu0 %v508
      %v548 = vpop.f32.mrf.mxu0
      %v549 = vadd.f32 %v484, %v548
      %550 = vdwg.mxu0
      %v551 = vmax.f32 %v528, -5.0
      %v552 = vmax.f32 %v531, -5.0
      %v553 = vmax.f32 %v534, -5.0
      %v554 = vmax.f32 %v537, -5.0
      %v555 = vmax.f32 %v540, -5.0
      %v556 = vmax.f32 %v543, -5.0
      %v557 = vmax.f32 %v546, -5.0
      %v558 = vmax.f32 %v549, -5.0
      %v559 = vmin.f32 %v551, 5.0
      %v560 = vmin.f32 %v552, 5.0
      %v561 = vmin.f32 %v553, 5.0
      %v562 = vmin.f32 %v554, 5.0
      %v563 = vmin.f32 %v555, 5.0
      %v564 = vmin.f32 %v556, 5.0
      %v565 = vmin.f32 %v557, 5.0
      %v566 = vmin.f32 %v558, 5.0
      %vm567 = vcmask 64512
      %568 = vst.msk [vmem:[%s280] sm:$0xff] %vm567, %v559
      %569 = vst.msk [vmem:[%s280 + $0x8] sm:$0xff] %vm567, %v560
      %570 = vst.msk [vmem:[%s280 + $0x10] sm:$0xff] %vm567, %v561
      %571 = vst.msk [vmem:[%s280 + $0x18] sm:$0xff] %vm567, %v562
      %572 = vst.msk [vmem:[%s280 + $0x20] sm:$0xff] %vm567, %v563
      %573 = vst.msk [vmem:[%s280 + $0x28] sm:$0xff] %vm567, %v564
      %574 = vst.msk [vmem:[%s280 + $0x30] sm:$0xff] %vm567, %v565
      %575 = vst.msk [vmem:[%s280 + $0x38] sm:$0xff] %vm567, %v566
      %s576 = smul.u32 8, %s18
      %p577 = scmp.lt.s32.totalorder %s576, 31
      %s578 = scalar_select %p577, %s576, 31
      %s579 = smul.addr %s578, 8
      %s580 = scalar_lea.vmem %s7, %s579
      // Predicated region
      $region49: #{tpu_custom_call.1} parent=47 // pred_check
        %p581 = pneg %p188
      $region50: #{tpu_custom_call.1} parent=47 // pred_check_branch
        %583 = sbr.rel (%p581) target = $region52
      $region51: #{tpu_custom_call.1} parent=47 // pred_region
        %s584 = smul.u32 8, %s18
      $region52: #{tpu_custom_call.1} parent=47 // pred_fallthru
        _
    $region48: #{tpu_custom_call.1} parent=5 // pred_fallthru
      _
    %p585 = scmp.le.s32.totalorder 2, %s13
    // Predicated region
    $region53: #{tpu_custom_call.1} parent=5 // pred_check
      %p586 = pneg %p585
    $region54: #{tpu_custom_call.1} parent=5 // pred_check_branch
      %588 = sbr.rel (%p586) target = $region56
    $region55: #{tpu_custom_call.1} parent=5 // pred_region
      %s589 = ssub.s32 %s13, 2
      // Predicated region
      $region57: #{tpu_custom_call.1} parent=55 // pred_check
        %p590 = pneg %p194
      $region58: #{tpu_custom_call.1} parent=55 // pred_check_branch
        %592 = sbr.rel (%p590) target = $region60
      $region59: #{tpu_custom_call.1} parent=55 // pred_region
        %s593 = smul.u32 8, %s19
        %p594 = scmp.lt.s32.totalorder %s593, 31
        %s595 = scalar_select %p594, %s593, 31
        %s596 = smul.addr %s595, 8
        %s597 = scalar_lea.vmem %s7, %s596
      $region60: #{tpu_custom_call.1} parent=55 // pred_fallthru
        _
    $region56: #{tpu_custom_call.1} parent=5 // pred_fallthru
      _
  $region6: #{tpu_custom_call.1} parent=0 // loop_footer
    %s17 = sadd.s32 1, %s13
  $region7: #{tpu_custom_call.1} parent=0 // loop_footer_branch
    %12 = sbr.rel target = $region3
  $region8: #{tpu_custom_call.1} parent=0 // loop_exit
    _

</llo_original>
